<compile_context>
chip_gen: v5e
topology: v5e:2x2
jax: 0.10.0
libtpu: 0.0.40
codegen_flags: <defaults>
</compile_context>

<pallas_src>
import functools

import jax
import jax.numpy as jnp
from jax.experimental import pallas as pl
from jax.experimental.pallas import tpu as pltpu

EPS = 1e-5
_LANE = 128
_SUBLANE = 8
_MAX_TILE_B = 256   # default rows/tile; large batches split -> both v7x TCs busy


def _round_up(n, m):
    return ((n + m - 1) // m) * m


def _cdiv(a, b):
    return -(-a // b)


# ---------------------------------------------------------------------------
# VMEM budgeting (generation-aware, honest about buffering)
# ---------------------------------------------------------------------------
def _vmem_ceiling_bytes():
    """Usable VMEM ceiling for this generation (v5e/v6e ~128 MiB, v7x 64 MiB)."""
    try:
        cap = getattr(pltpu.get_tpu_info(), "vmem_capacity_bytes", None)
        if cap:
            return int(cap) * 7 // 8          # leave headroom for the compiler
    except Exception:
        pass
    return 48 * 1024 * 1024                   # conservative: fits every generation


def _vmem_limit_bytes(rows, n_obs_p, h_p, out_p, w_bytes, z_bytes, *, pipelined):
    f32 = 4
    wbuf = 2 if pipelined else 1              # BlockSpec double-buffers constants
    weights = wbuf * (n_obs_p * h_p + 3 * h_p * h_p + h_p * out_p) * w_bytes
    vectors = wbuf * (2 * n_obs_p + 6 * h_p + 2 * out_p) * f32
    iobuf = (2 if pipelined else 1) * rows * (
        n_obs_p * f32 + out_p * f32 + h_p * (f32 + z_bytes))
    live = 6 * rows * h_p * f32               # in-flight trunk activations
    need = weights + vectors + iobuf + live
    # Never clamp below the computed need; stay under the physical ceiling.
    return int(min(_vmem_ceiling_bytes(), max(int(1.5 * need), 16 * 1024 * 1024)))


# ---------------------------------------------------------------------------
# Kernels
# ---------------------------------------------------------------------------
def _fused_kernel(x_ref, g_in_ref, be_in_ref,
                  w1_ref, b1_ref, w2_ref, b2_ref,
                  w3_ref, b3_ref, w4_ref, b4_ref,
                  g_h_ref, be_h_ref, wh_ref, bh_ref,
                  o_ref, *, n_rows, n_actions, compute_dtype):
    """Whole forward in one kernel (single batch tile resident in VMEM):
    input-BN stats -> trunk -> hidden-BN stats -> fused 3-head matmul."""
    x = x_ref[...]
    rows = x.shape[0]
    inv_n = 1.0 / n_rows
    row_mask = (jax.lax.broadcasted_iota(jnp.int32, (rows, 1), 0)
                < n_rows).astype(jnp.float32)

    def bn_fold(a, g_ref, be_ref):
        # training-mode (biased-variance) BatchNorm over the real batch rows
        mu = jnp.sum(a * row_mask, axis=0, keepdims=True) * inv_n
        var = jnp.sum(jnp.square(a - mu) * row_mask, axis=0, keepdims=True) * inv_n
        s = g_ref[...] * jax.lax.rsqrt(var + EPS)
        t = be_ref[...] - mu * s
        return a * s + t

    def dot(a, w_ref):   # weights pre-cast offline; only the activation is cast
        return jnp.dot(a.astype(compute_dtype), w_ref[...],
                       preferred_element_type=jnp.float32)

    xn = bn_fold(x, g_in_ref, be_in_ref)
    z = jnp.maximum(dot(xn, w1_ref) + b1_ref[...], 0.0)
    y = jnp.maximum(dot(z, w2_ref) + b2_ref[...], 0.0)
    y = jnp.maximum(dot(y, w3_ref) + b3_ref[...], 0.0)
    z = z + jnp.maximum(dot(y, w4_ref) + b4_ref[...], 0.0)
    zn = bn_fold(z, g_h_ref, be_h_ref)

    h = dot(zn, wh_ref) + bh_ref[...]
    col = jax.lax.broadcasted_iota(jnp.int32, h.shape, dimension=1)
    o_ref[...] = jnp.where(col < n_actions, jax.nn.sigmoid(h) - 1.0, h)


def _trunk_kernel(x_ref, s_in_ref, t_in_ref,
                  w1_ref, b1_ref, w2_ref, b2_ref,
                  w3_ref, b3_ref, w4_ref, b4_ref,
                  z_ref, zsum_ref, zsq_ref,
                  *, n_rows, compute_dtype):
    """Folded input-BN + residual ReLU trunk; emits masked per-tile partial
    sums so hidden-BN statistics never re-read z from HBM."""

    def dot(a, w_ref):
        return jnp.dot(a.astype(compute_dtype), w_ref[...],
                       preferred_element_type=jnp.float32)

    xn = x_ref[...] * s_in_ref[...] + t_in_ref[...]
    z = jnp.maximum(dot(xn, w1_ref) + b1_ref[...], 0.0)
    y = jnp.maximum(dot(z, w2_ref) + b2_ref[...], 0.0)
    y = jnp.maximum(dot(y, w3_ref) + b3_ref[...], 0.0)
    z = z + jnp.maximum(dot(y, w4_ref) + b4_ref[...], 0.0)
    z_ref[...] = z.astype(z_ref.dtype)

    tile_b, h_p = z.shape
    row0 = pl.program_id(0) * tile_b
    in_batch = (row0 + jax.lax.broadcasted_iota(jnp.int32, (tile_b, 1), 0)
                < n_rows).astype(jnp.float32)
    zm = z * in_batch
    s1 = jnp.sum(zm, axis=0, keepdims=True)          # (1, h_p) masked sum z
    s2 = jnp.sum(zm * z, axis=0, keepdims=True)      # (1, h_p) masked sum z^2
    zsum_ref[...] = jnp.broadcast_to(s1[:, None, :], (1, _SUBLANE, h_p))
    zsq_ref[...] = jnp.broadcast_to(s2[:, None, :], (1, _SUBLANE, h_p))


def _heads_kernel(z_ref, s_h_ref, t_h_ref, wh_ref, bh_ref, o_ref,
                  *, n_actions, compute_dtype):
    """Folded hidden-BN + fused 3-head matmul; sigmoid-1 on head-1 columns."""
    zn = z_ref[...].astype(jnp.float32) * s_h_ref[...] + t_h_ref[...]
    h = jnp.dot(zn.astype(compute_dtype), wh_ref[...],
                preferred_element_type=jnp.float32) + bh_ref[...]
    col = jax.lax.broadcasted_iota(jnp.int32, h.shape, dimension=1)
    o_ref[...] = jnp.where(col < n_actions, jax.nn.sigmoid(h) - 1.0, h)


# ---------------------------------------------------------------------------
# One-time parameter preparation (off the per-call critical path)
# ---------------------------------------------------------------------------
def prepare_params(params, use_bf16=False):
    """Transpose weights to [in,out], zero-pad lane dims to 128 multiples, fuse
    the 3 heads into one [H, 3A] matrix, pre-cast matmul weights if bf16."""
    wdt = jnp.bfloat16 if use_bf16 else jnp.float32
    H, n_obs = params["w1"].shape
    A = params["wb1"].shape[0]

    n_obs_p = _round_up(n_obs, _LANE)
    h_p = _round_up(H, _LANE)
    out_p = _round_up(3 * A, _LANE)

    def lin(w, b, in_p, o_p):
        wt = jnp.transpose(w).astype(jnp.float32)
        wt = jnp.pad(wt, ((0, in_p - wt.shape[0]), (0, o_p - wt.shape[1])))
        bp = jnp.pad(b.astype(jnp.float32), (0, o_p - b.shape[0]))
        return wt.astype(wdt), bp.reshape(1, -1)

    w1, b1 = lin(params["w1"], params["b1"], n_obs_p, h_p)
    w2, b2 = lin(params["w2"], params["b2"], h_p, h_p)
    w3, b3 = lin(params["w3"], params["b3"], h_p, h_p)
    w4, b4 = lin(params["w4"], params["b4"], h_p, h_p)

    # Fused heads: columns [0:A]=head1, [A:2A]=head2, [2A:3A]=head3.
    # TODO(synk): the PyTorch projection branch (ort + (z - ort)) is an exact
    # identity in the forward pass, so heads 2/3 reduce to plain linear layers
    # and the AxA linalg.solve is dropped (detach-based gradient semantics of
    # the original are not reproduced here).
    wh = jnp.concatenate([jnp.transpose(params["wb1"]),
                          jnp.transpose(params["wb2"]),
                          jnp.transpose(params["wb3"])], axis=1).astype(jnp.float32)
    bh = jnp.concatenate([params["bb1"], params["bb2"],
                          params["bb3"]]).astype(jnp.float32)
    wh = jnp.pad(wh, ((0, h_p - H), (0, out_p - 3 * A))).astype(wdt)
    bh = jnp.pad(bh, (0, out_p - 3 * A)).reshape(1, -1)

    def pad_vec(v, n_p):   # gamma/beta zero-padded -> padded features stay 0
        return jnp.pad(v.astype(jnp.float32), (0, n_p - v.shape[0])).reshape(1, -1)

    return dict(
        w1=w1, b1=b1, w2=w2, b2=b2, w3=w3, b3=b3, w4=w4, b4=b4, wh=wh, bh=bh,
        bn_in_g=pad_vec(params["bn_in_g"], n_obs_p),
        bn_in_b=pad_vec(params["bn_in_b"], n_obs_p),
        bn_g=pad_vec(params["bn_g"], h_p),
        bn_b=pad_vec(params["bn_b"], h_p),
    )


# ---------------------------------------------------------------------------
# Forward paths
# ---------------------------------------------------------------------------
def _fused_forward(x_p, prepped, *, n_rows, n_actions, compute_dtype, w_bytes):
    b_p, n_obs_p = x_p.shape
    h_p = prepped["w1"].shape[1]
    out_p = prepped["wh"].shape[1]
    limit = _vmem_limit_bytes(b_p, n_obs_p, h_p, out_p, w_bytes, w_bytes,
                              pipelined=False)
    return pl.pallas_call(
        functools.partial(_fused_kernel, n_rows=n_rows, n_actions=n_actions,
                          compute_dtype=compute_dtype),
        out_shape=jax.ShapeDtypeStruct((b_p, out_p), jnp.float32),
        compiler_params=pltpu.CompilerParams(vmem_limit_bytes=limit),
    )(x_p, prepped["bn_in_g"], prepped["bn_in_b"],
      prepped["w1"], prepped["b1"], prepped["w2"], prepped["b2"],
      prepped["w3"], prepped["b3"], prepped["w4"], prepped["b4"],
      prepped["bn_g"], prepped["bn_b"], prepped["wh"], prepped["bh"])


def _tiled_forward(x_p, prepped, *, n_rows, n_actions, tile_b, compute_dtype,
                   w_bytes):
    b_p, n_obs_p = x_p.shape
    h_p = prepped["w1"].shape[1]
    out_p = prepped["wh"].shape[1]
    n_tiles = b_p // tile_b
    z_bytes = jnp.dtype(compute_dtype).itemsize

    # input BatchNorm1d (training mode) stats on the real rows, folded to one
    # per-feature scale/shift (zero-padded gamma keeps padded columns at 0).
    xr = x_p[:n_rows]
    mu_in = jnp.mean(xr, axis=0, keepdims=True)
    var_in = jnp.mean(jnp.square(xr - mu_in), axis=0, keepdims=True)
    s_in = prepped["bn_in_g"] * jax.lax.rsqrt(var_in + EPS)
    t_in = prepped["bn_in_b"] - mu_in * s_in

    row = lambda i: (i, 0)
    const = lambda i: (0, 0)
    cparams = pltpu.CompilerParams(
        dimension_semantics=("parallel",),
        vmem_limit_bytes=_vmem_limit_bytes(tile_b, n_obs_p, h_p, out_p,
                                           w_bytes, z_bytes, pipelined=True))

    # kernel 1: trunk MLP (batch-tiled, weights VMEM-resident) + BN partial sums
    z, zsum, zsq = pl.pallas_call(
        functools.partial(_trunk_kernel, n_rows=n_rows,
                          compute_dtype=compute_dtype),
        grid=(n_tiles,),
        out_shape=(jax.ShapeDtypeStruct((b_p, h_p), compute_dtype),
                   jax.ShapeDtypeStruct((n_tiles, _SUBLANE, h_p), jnp.float32),
                   jax.ShapeDtypeStruct((n_tiles, _SUBLANE, h_p), jnp.float32)),
        in_specs=[
            pl.BlockSpec((tile_b, n_obs_p), row),
            pl.BlockSpec((1, n_obs_p), const),
            pl.BlockSpec((1, n_obs_p), const),
            pl.BlockSpec((n_obs_p, h_p), const), pl.BlockSpec((1, h_p), const),
            pl.BlockSpec((h_p, h_p), const), pl.BlockSpec((1, h_p), const),
            pl.BlockSpec((h_p, h_p), const), pl.BlockSpec((1, h_p), const),
            pl.BlockSpec((h_p, h_p), const), pl.BlockSpec((1, h_p), const),
        ],
        out_specs=(pl.BlockSpec((tile_b, h_p), row),
                   pl.BlockSpec((1, _SUBLANE, h_p), lambda i: (i, 0, 0)),
                   pl.BlockSpec((1, _SUBLANE, h_p), lambda i: (i, 0, 0))),
        compiler_params=cparams,
    )(x_p, s_in, t_in,
      prepped["w1"], prepped["b1"], prepped["w2"], prepped["b2"],
      prepped["w3"], prepped["b3"], prepped["w4"], prepped["b4"])

    # hidden BatchNorm1d (training mode) from tiny [n_tiles, h_p] partial sums
    inv_n = 1.0 / n_rows
    mu_h = jnp.sum(zsum[:, 0, :], axis=0, keepdims=True) * inv_n
    ex2 = jnp.sum(zsq[:, 0, :], axis=0, keepdims=True) * inv_n
    var_h = jnp.maximum(ex2 - jnp.square(mu_h), 0.0)
    s_h = prepped["bn_g"] * jax.lax.rsqrt(var_h + EPS)
    t_h = prepped["bn_b"] - mu_h * s_h

    # kernel 2: normalize + fused 3-head matmul (lane-dense 128-padded output)
    heads = pl.pallas_call(
        functools.partial(_heads_kernel, n_actions=n_actions,
                          compute_dtype=compute_dtype),
        grid=(n_tiles,),
        out_shape=jax.ShapeDtypeStruct((b_p, out_p), jnp.float32),
        in_specs=[
            pl.BlockSpec((tile_b, h_p), row),
            pl.BlockSpec((1, h_p), const),
            pl.BlockSpec((1, h_p), const),
            pl.BlockSpec((h_p, out_p), const),
            pl.BlockSpec((1, out_p), const),
        ],
        out_specs=pl.BlockSpec((tile_b, out_p), row),
        compiler_params=cparams,
    )(z, s_h, t_h, prepped["wh"], prepped["bh"])
    return heads


@functools.partial(jax.jit, static_argnames=("n_actions", "max_tile_b"))
def lex_q_forward(x, prepped, *, n_actions, max_tile_b=_MAX_TILE_B):
    """Forward pass of Lex_Q_Network -> [B, n_actions, 3] float32
    (== torch.stack((o1, o2, o3), dim=2)).  BatchNorm uses training-mode
    (per-batch, biased-variance) statistics, matching a freshly constructed
    module called without .eval()."""
    compute_dtype = prepped["w1"].dtype
    w_bytes = jnp.dtype(compute_dtype).itemsize

    B, n_obs = x.shape
    n_obs_p, h_p = prepped["w1"].shape
    out_p = prepped["wh"].shape[1]
    x = x.astype(jnp.float32)

    # Balanced batch tiling: padding <= tile_b-1 rows, never a whole extra tile.
    n_tiles = _cdiv(B, max_tile_b)
    tile_b = _round_up(_cdiv(B, n_tiles), _SUBLANE)
    b_p = n_tiles * tile_b
    x_p = jnp.pad(x, ((0, b_p - B), (0, n_obs_p - n_obs)))

    if n_tiles == 1:
        heads = _fused_forward(x_p, prepped, n_rows=B, n_actions=n_actions,
                               compute_dtype=compute_dtype, w_bytes=w_bytes)
    else:
        heads = _tiled_forward(x_p, prepped, n_rows=B, n_actions=n_actions,
                               tile_b=tile_b, compute_dtype=compute_dtype,
                               w_bytes=w_bytes)

    # [B, 3A] -> [B, 3, A] -> [B, A, 3]   (== torch.stack(..., dim=2))
    out = heads[:B, :3 * n_actions].reshape(B, 3, n_actions)
    return jnp.transpose(out, (0, 2, 1))


# ---------------------------------------------------------------------------
# PyTorch-style initialization and a pure-JAX reference for verification
# ---------------------------------------------------------------------------
def init_params(key, n_obs, hidden, n_actions):
    keys = jax.random.split(key, 14)

    def lin(kw, kb, fan_in, fan_out):
        bound = 1.0 / jnp.sqrt(fan_in)
        w = jax.random.uniform(kw, (fan_out, fan_in), jnp.float32, -bound, bound)
        b = jax.random.uniform(kb, (fan_out,), jnp.float32, -bound, bound)
        return w, b

    p = {}
    p["w1"], p["b1"] = lin(keys[0], keys[1], n_obs, hidden)
    p["w2"], p["b2"] = lin(keys[2], keys[3], hidden, hidden)
    p["w3"], p["b3"] = lin(keys[4], keys[5], hidden, hidden)
    p["w4"], p["b4"] = lin(keys[6], keys[7], hidden, hidden)
    p["wb1"], p["bb1"] = lin(keys[8], keys[9], hidden, n_actions)
    p["wb2"], p["bb2"] = lin(keys[10], keys[11], hidden, n_actions)
    p["wb3"], p["bb3"] = lin(keys[12], keys[13], hidden, n_actions)
    p["bn_in_g"] = jnp.ones((n_obs,), jnp.float32)
    p["bn_in_b"] = jnp.zeros((n_obs,), jnp.float32)
    p["bn_g"] = jnp.ones((hidden,), jnp.float32)
    p["bn_b"] = jnp.zeros((hidden,), jnp.float32)
    return p


def reference_forward(x, params, n_actions):
    """Pure-JAX reference of the PyTorch forward (training-mode BatchNorm)."""
    x = x.astype(jnp.float32)
    hi = jax.lax.Precision.HIGHEST

    def bn(a, g, b):
        mu = jnp.mean(a, axis=0, keepdims=True)
        var = jnp.mean(jnp.square(a - mu), axis=0, keepdims=True)
        return (a - mu) * jax.lax.rsqrt(var + EPS) * g + b

    def lin(a, w, b):
        return jnp.dot(a, w.T, precision=hi) + b

    xn = bn(x, params["bn_in_g"], params["bn_in_b"])
    z = jax.nn.relu(lin(xn, params["w1"], params["b1"]))
    y = jax.nn.relu(lin(z, params["w2"], params["b2"]))
    y = jax.nn.relu(lin(y, params["w3"], params["b3"]))
    z = z + jax.nn.relu(lin(y, params["w4"], params["b4"]))
    z = bn(z, params["bn_g"], params["bn_b"])
    # projection branch: ort + (z - ort) == z in the forward pass
    o1 = jax.nn.sigmoid(lin(z, params["wb1"], params["bb1"])) - 1.0
    o2 = lin(z, params["wb2"], params["bb2"])
    o3 = lin(z, params["wb3"], params["bb3"])
    return jnp.stack((o1, o2, o3), axis=2)


if __name__ == "__main__":
    n_obs, hidden, n_actions = 8, 32, 3

    key = jax.random.PRNGKey(0)
    kx, kp = jax.random.split(key)
    params = init_params(kp, n_obs, hidden, n_actions)
    prepped = prepare_params(params)          # one-time prep, off the hot path

    # Case 1: small batch -> single fully-fused kernel (everything in VMEM).
    B1 = 8
    x1 = jax.random.normal(kx, (B1, n_obs), jnp.float32)
    out1 = lex_q_forward(x1, prepped, n_actions=n_actions)
    jax.block_until_ready(out1)
    assert out1.shape == (B1, n_actions, 3), out1.shape
    assert out1.dtype == jnp.float32
    assert bool(jnp.all(jnp.isfinite(out1)))
    ref1 = reference_forward(x1, params, n_actions)
    assert bool(jnp.allclose(out1, ref1, atol=5e-3, rtol=5e-3))

    # Case 2: larger batch with a tiny tile cap -> batch-tiled two-kernel path
    # (trunk with per-tile BN partial sums + fused heads kernel).
    B2 = 40
    x2 = jax.random.normal(jax.random.PRNGKey(1), (B2, n_obs), jnp.float32)
    out2 = lex_q_forward(x2, prepped, n_actions=n_actions, max_tile_b=16)
    jax.block_until_ready(out2)
    assert out2.shape == (B2, n_actions, 3), out2.shape
    assert bool(jnp.all(jnp.isfinite(out2)))
    ref2 = reference_forward(x2, params, n_actions)
    assert bool(jnp.allclose(out2, ref2, atol=5e-3, rtol=5e-3))

    print("KERNEL_OK")
</pallas_src>

<mosaic_0001>
module attributes {stable_mosaic.version = 11 : i64} {
  func.func @_fused_kernel(%arg0: memref<8x128xf32, #tpu.memory_space<vmem>>, %arg1: memref<1x128xf32, #tpu.memory_space<vmem>>, %arg2: memref<1x128xf32, #tpu.memory_space<vmem>>, %arg3: memref<128x128xf32, #tpu.memory_space<vmem>>, %arg4: memref<1x128xf32, #tpu.memory_space<vmem>>, %arg5: memref<128x128xf32, #tpu.memory_space<vmem>>, %arg6: memref<1x128xf32, #tpu.memory_space<vmem>>, %arg7: memref<128x128xf32, #tpu.memory_space<vmem>>, %arg8: memref<1x128xf32, #tpu.memory_space<vmem>>, %arg9: memref<128x128xf32, #tpu.memory_space<vmem>>, %arg10: memref<1x128xf32, #tpu.memory_space<vmem>>, %arg11: memref<1x128xf32, #tpu.memory_space<vmem>>, %arg12: memref<1x128xf32, #tpu.memory_space<vmem>>, %arg13: memref<128x128xf32, #tpu.memory_space<vmem>>, %arg14: memref<1x128xf32, #tpu.memory_space<vmem>>, %arg15: memref<8x128xf32, #tpu.memory_space<vmem>>) attributes {dimension_semantics = [], scalar_prefetch = 0 : i64, scratch_operands = 0 : i64, tpu.core_type = #tpu.core_type<tc>} {
    %c0 = arith.constant 0 : index
    %c0_0 = arith.constant 0 : index
    %0 = vector.load %arg0[%c0, %c0_0] : memref<8x128xf32, #tpu.memory_space<vmem>>, vector<8x128xf32>
    %1 = tpu.iota {dimensions = array<i32: 0>} : vector<8x1xi32>
    %c8_i32 = arith.constant 8 : i32
    %2 = vector.broadcast %c8_i32 : i32 to vector<8x1xi32>
    %3 = arith.cmpi slt, %1, %2 : vector<8x1xi32>
    %4 = arith.extui %3 : vector<8x1xi1> to vector<8x1xi32>
    %5 = arith.sitofp %4 : vector<8x1xi32> to vector<8x1xf32>
    %6 = vector.broadcast %5 : vector<8x1xf32> to vector<8x128xf32>
    %7 = arith.mulf %0, %6 : vector<8x128xf32>
    %cst = arith.constant dense<0.000000e+00> : vector<128xf32>
    %8 = vector.multi_reduction <add>, %7, %cst [0] : vector<8x128xf32> to vector<128xf32>
    %9 = vector.shape_cast %8 : vector<128xf32> to vector<1x128xf32>
    %cst_1 = arith.constant 1.250000e-01 : f32
    %10 = vector.broadcast %cst_1 : f32 to vector<1x128xf32>
    %11 = arith.mulf %9, %10 : vector<1x128xf32>
    %12 = vector.broadcast %11 : vector<1x128xf32> to vector<8x128xf32>
    %13 = arith.subf %0, %12 : vector<8x128xf32>
    %14 = arith.mulf %13, %13 : vector<8x128xf32>
    %15 = vector.broadcast %5 : vector<8x1xf32> to vector<8x128xf32>
    %16 = arith.mulf %14, %15 : vector<8x128xf32>
    %cst_2 = arith.constant dense<0.000000e+00> : vector<128xf32>
    %17 = vector.multi_reduction <add>, %16, %cst_2 [0] : vector<8x128xf32> to vector<128xf32>
    %18 = vector.shape_cast %17 : vector<128xf32> to vector<1x128xf32>
    %cst_3 = arith.constant 1.250000e-01 : f32
    %19 = vector.broadcast %cst_3 : f32 to vector<1x128xf32>
    %20 = arith.mulf %18, %19 : vector<1x128xf32>
    %c0_4 = arith.constant 0 : index
    %c0_5 = arith.constant 0 : index
    %21 = vector.load %arg1[%c0_4, %c0_5] : memref<1x128xf32, #tpu.memory_space<vmem>>, vector<1x128xf32>
    %cst_6 = arith.constant 9.99999974E-6 : f32
    %22 = vector.broadcast %cst_6 : f32 to vector<1x128xf32>
    %23 = arith.addf %20, %22 : vector<1x128xf32>
    %24 = math.rsqrt %23 : vector<1x128xf32>
    %25 = arith.mulf %21, %24 : vector<1x128xf32>
    %c0_7 = arith.constant 0 : index
    %c0_8 = arith.constant 0 : index
    %26 = vector.load %arg2[%c0_7, %c0_8] : memref<1x128xf32, #tpu.memory_space<vmem>>, vector<1x128xf32>
    %27 = arith.mulf %11, %25 : vector<1x128xf32>
    %28 = arith.subf %26, %27 : vector<1x128xf32>
    %29 = vector.broadcast %25 : vector<1x128xf32> to vector<8x128xf32>
    %30 = arith.mulf %0, %29 : vector<8x128xf32>
    %31 = vector.broadcast %28 : vector<1x128xf32> to vector<8x128xf32>
    %32 = arith.addf %30, %31 : vector<8x128xf32>
    %c0_9 = arith.constant 0 : index
    %c0_10 = arith.constant 0 : index
    %33 = vector.load %arg3[%c0_9, %c0_10] : memref<128x128xf32, #tpu.memory_space<vmem>>, vector<128x128xf32>
    %cst_11 = arith.constant dense<0.000000e+00> : vector<8x128xf32>
    %34 = tpu.matmul %32, %33, %cst_11 {dimension_numbers = #tpu.dot_dimension_numbers<[1], [0], [0], [1], [0, 0, 1, 1], [], []>} : vector<8x128xf32>, vector<128x128xf32>, vector<8x128xf32> -> vector<8x128xf32>
    %c0_12 = arith.constant 0 : index
    %c0_13 = arith.constant 0 : index
    %35 = vector.load %arg4[%c0_12, %c0_13] : memref<1x128xf32, #tpu.memory_space<vmem>>, vector<1x128xf32>
    %36 = vector.broadcast %35 : vector<1x128xf32> to vector<8x128xf32>
    %37 = arith.addf %34, %36 : vector<8x128xf32>
    %cst_14 = arith.constant 0.000000e+00 : f32
    %38 = vector.broadcast %cst_14 : f32 to vector<8x128xf32>
    %39 = arith.maximumf %37, %38 : vector<8x128xf32>
    %c0_15 = arith.constant 0 : index
    %c0_16 = arith.constant 0 : index
    %40 = vector.load %arg5[%c0_15, %c0_16] : memref<128x128xf32, #tpu.memory_space<vmem>>, vector<128x128xf32>
    %cst_17 = arith.constant dense<0.000000e+00> : vector<8x128xf32>
    %41 = tpu.matmul %39, %40, %cst_17 {dimension_numbers = #tpu.dot_dimension_numbers<[1], [0], [0], [1], [0, 0, 1, 1], [], []>} : vector<8x128xf32>, vector<128x128xf32>, vector<8x128xf32> -> vector<8x128xf32>
    %c0_18 = arith.constant 0 : index
    %c0_19 = arith.constant 0 : index
    %42 = vector.load %arg6[%c0_18, %c0_19] : memref<1x128xf32, #tpu.memory_space<vmem>>, vector<1x128xf32>
    %43 = vector.broadcast %42 : vector<1x128xf32> to vector<8x128xf32>
    %44 = arith.addf %41, %43 : vector<8x128xf32>
    %cst_20 = arith.constant 0.000000e+00 : f32
    %45 = vector.broadcast %cst_20 : f32 to vector<8x128xf32>
    %46 = arith.maximumf %44, %45 : vector<8x128xf32>
    %c0_21 = arith.constant 0 : index
    %c0_22 = arith.constant 0 : index
    %47 = vector.load %arg7[%c0_21, %c0_22] : memref<128x128xf32, #tpu.memory_space<vmem>>, vector<128x128xf32>
    %cst_23 = arith.constant dense<0.000000e+00> : vector<8x128xf32>
    %48 = tpu.matmul %46, %47, %cst_23 {dimension_numbers = #tpu.dot_dimension_numbers<[1], [0], [0], [1], [0, 0, 1, 1], [], []>} : vector<8x128xf32>, vector<128x128xf32>, vector<8x128xf32> -> vector<8x128xf32>
    %c0_24 = arith.constant 0 : index
    %c0_25 = arith.constant 0 : index
    %49 = vector.load %arg8[%c0_24, %c0_25] : memref<1x128xf32, #tpu.memory_space<vmem>>, vector<1x128xf32>
    %50 = vector.broadcast %49 : vector<1x128xf32> to vector<8x128xf32>
    %51 = arith.addf %48, %50 : vector<8x128xf32>
    %cst_26 = arith.constant 0.000000e+00 : f32
    %52 = vector.broadcast %cst_26 : f32 to vector<8x128xf32>
    %53 = arith.maximumf %51, %52 : vector<8x128xf32>
    %c0_27 = arith.constant 0 : index
    %c0_28 = arith.constant 0 : index
    %54 = vector.load %arg9[%c0_27, %c0_28] : memref<128x128xf32, #tpu.memory_space<vmem>>, vector<128x128xf32>
    %cst_29 = arith.constant dense<0.000000e+00> : vector<8x128xf32>
    %55 = tpu.matmul %53, %54, %cst_29 {dimension_numbers = #tpu.dot_dimension_numbers<[1], [0], [0], [1], [0, 0, 1, 1], [], []>} : vector<8x128xf32>, vector<128x128xf32>, vector<8x128xf32> -> vector<8x128xf32>
    %c0_30 = arith.constant 0 : index
    %c0_31 = arith.constant 0 : index
    %56 = vector.load %arg10[%c0_30, %c0_31] : memref<1x128xf32, #tpu.memory_space<vmem>>, vector<1x128xf32>
    %57 = vector.broadcast %56 : vector<1x128xf32> to vector<8x128xf32>
    %58 = arith.addf %55, %57 : vector<8x128xf32>
    %cst_32 = arith.constant 0.000000e+00 : f32
    %59 = vector.broadcast %cst_32 : f32 to vector<8x128xf32>
    %60 = arith.maximumf %58, %59 : vector<8x128xf32>
    %61 = arith.addf %39, %60 : vector<8x128xf32>
    %62 = vector.broadcast %5 : vector<8x1xf32> to vector<8x128xf32>
    %63 = arith.mulf %61, %62 : vector<8x128xf32>
    %cst_33 = arith.constant dense<0.000000e+00> : vector<128xf32>
    %64 = vector.multi_reduction <add>, %63, %cst_33 [0] : vector<8x128xf32> to vector<128xf32>
    %65 = vector.shape_cast %64 : vector<128xf32> to vector<1x128xf32>
    %cst_34 = arith.constant 1.250000e-01 : f32
    %66 = vector.broadcast %cst_34 : f32 to vector<1x128xf32>
    %67 = arith.mulf %65, %66 : vector<1x128xf32>
    %68 = vector.broadcast %67 : vector<1x128xf32> to vector<8x128xf32>
    %69 = arith.subf %61, %68 : vector<8x128xf32>
    %70 = arith.mulf %69, %69 : vector<8x128xf32>
    %71 = vector.broadcast %5 : vector<8x1xf32> to vector<8x128xf32>
    %72 = arith.mulf %70, %71 : vector<8x128xf32>
    %cst_35 = arith.constant dense<0.000000e+00> : vector<128xf32>
    %73 = vector.multi_reduction <add>, %72, %cst_35 [0] : vector<8x128xf32> to vector<128xf32>
    %74 = vector.shape_cast %73 : vector<128xf32> to vector<1x128xf32>
    %cst_36 = arith.constant 1.250000e-01 : f32
    %75 = vector.broadcast %cst_36 : f32 to vector<1x128xf32>
    %76 = arith.mulf %74, %75 : vector<1x128xf32>
    %c0_37 = arith.constant 0 : index
    %c0_38 = arith.constant 0 : index
    %77 = vector.load %arg11[%c0_37, %c0_38] : memref<1x128xf32, #tpu.memory_space<vmem>>, vector<1x128xf32>
    %cst_39 = arith.constant 9.99999974E-6 : f32
    %78 = vector.broadcast %cst_39 : f32 to vector<1x128xf32>
    %79 = arith.addf %76, %78 : vector<1x128xf32>
    %80 = math.rsqrt %79 : vector<1x128xf32>
    %81 = arith.mulf %77, %80 : vector<1x128xf32>
    %c0_40 = arith.constant 0 : index
    %c0_41 = arith.constant 0 : index
    %82 = vector.load %arg12[%c0_40, %c0_41] : memref<1x128xf32, #tpu.memory_space<vmem>>, vector<1x128xf32>
    %83 = arith.mulf %67, %81 : vector<1x128xf32>
    %84 = arith.subf %82, %83 : vector<1x128xf32>
    %85 = vector.broadcast %81 : vector<1x128xf32> to vector<8x128xf32>
    %86 = arith.mulf %61, %85 : vector<8x128xf32>
    %87 = vector.broadcast %84 : vector<1x128xf32> to vector<8x128xf32>
    %88 = arith.addf %86, %87 : vector<8x128xf32>
    %c0_42 = arith.constant 0 : index
    %c0_43 = arith.constant 0 : index
    %89 = vector.load %arg13[%c0_42, %c0_43] : memref<128x128xf32, #tpu.memory_space<vmem>>, vector<128x128xf32>
    %cst_44 = arith.constant dense<0.000000e+00> : vector<8x128xf32>
    %90 = tpu.matmul %88, %89, %cst_44 {dimension_numbers = #tpu.dot_dimension_numbers<[1], [0], [0], [1], [0, 0, 1, 1], [], []>} : vector<8x128xf32>, vector<128x128xf32>, vector<8x128xf32> -> vector<8x128xf32>
    %c0_45 = arith.constant 0 : index
    %c0_46 = arith.constant 0 : index
    %91 = vector.load %arg14[%c0_45, %c0_46] : memref<1x128xf32, #tpu.memory_space<vmem>>, vector<1x128xf32>
    %92 = vector.broadcast %91 : vector<1x128xf32> to vector<8x128xf32>
    %93 = arith.addf %90, %92 : vector<8x128xf32>
    %94 = tpu.iota {dimensions = array<i32: 1>} : vector<8x128xi32>
    %c3_i32 = arith.constant 3 : i32
    %95 = vector.broadcast %c3_i32 : i32 to vector<8x128xi32>
    %96 = arith.cmpi slt, %94, %95 : vector<8x128xi32>
    %97 = arith.negf %93 : vector<8x128xf32>
    %98 = math.exp %97 : vector<8x128xf32>
    %cst_47 = arith.constant 1.000000e+00 : f32
    %99 = vector.broadcast %cst_47 : f32 to vector<8x128xf32>
    %100 = arith.addf %99, %98 : vector<8x128xf32>
    %101 = arith.divf %99, %100 : vector<8x128xf32>
    %cst_48 = arith.constant 1.000000e+00 : f32
    %102 = vector.broadcast %cst_48 : f32 to vector<8x128xf32>
    %103 = arith.subf %101, %102 : vector<8x128xf32>
    %104 = arith.select %96, %103, %93 : vector<8x128xi1>, vector<8x128xf32>
    %c0_49 = arith.constant 0 : index
    %c0_50 = arith.constant 0 : index
    %105 = vector.load %arg15[%c0_49, %c0_50] : memref<8x128xf32, #tpu.memory_space<vmem>>, vector<8x128xf32>
    tpu.vector_store %arg15[%c0_49, %c0_50], %104 {strides = array<i32>} : memref<8x128xf32, #tpu.memory_space<vmem>>, vector<8x128xf32>,
    return
  }
}

</mosaic_0001>

<llo_original>
// kernel: lex_q_forward.1
$region0: #{lex_q_forward.1}
  #allocation0 [shape = 'u32[]', space=smem, size = 0x4, offset = 0x4, fixed_abs, tag = 'smem constant byte address 0x4 - core index']
  #allocation1 [shape = 'u32[72,128]{1,0:T(1,128)}', space=vmem, size = 0x9000, scoped, tag = 'internal scratch']
  %s0 = inlined_call_operand.vmem [shape: f32[8,128], index: 0, kind: input, shape index: {}]
  %s1 = inlined_call_operand.vmem [shape: f32[1,128], index: 1, kind: input, shape index: {}]
  %s2 = inlined_call_operand.vmem [shape: f32[1,128], index: 2, kind: input, shape index: {}]
  %s3 = inlined_call_operand.hbm [shape: f32[128,128], index: 3, kind: input, shape index: {}]
  %s4 = inlined_call_operand.vmem [shape: f32[1,128], index: 4, kind: input, shape index: {}]
  %s5 = inlined_call_operand.hbm [shape: f32[128,128], index: 5, kind: input, shape index: {}]
  %s6 = inlined_call_operand.vmem [shape: f32[1,128], index: 6, kind: input, shape index: {}]
  %s7 = inlined_call_operand.hbm [shape: f32[128,128], index: 7, kind: input, shape index: {}]
  %s8 = inlined_call_operand.vmem [shape: f32[1,128], index: 8, kind: input, shape index: {}]
  %s9 = inlined_call_operand.hbm [shape: f32[128,128], index: 9, kind: input, shape index: {}]
  %s10 = inlined_call_operand.vmem [shape: f32[1,128], index: 10, kind: input, shape index: {}]
  %s11 = inlined_call_operand.vmem [shape: f32[1,128], index: 11, kind: input, shape index: {}]
  %s12 = inlined_call_operand.vmem [shape: f32[1,128], index: 12, kind: input, shape index: {}]
  %s13 = inlined_call_operand.hbm [shape: f32[128,128], index: 13, kind: input, shape index: {}]
  %s14 = inlined_call_operand.vmem [shape: f32[1,128], index: 14, kind: input, shape index: {}]
  %s15 = inlined_call_operand.vmem [shape: f32[8,128], index: 15, kind: output, shape index: {}]
  %s16 = sld [smem:[#allocation0]]
  $region90: #{lex_q_forward.1} parent=0
    _
  %s18 = ssub.s32 1, %s16
  %s19 = scalar_select 0, %s18, %s16
  $region1: #{lex_q_forward.1} parent=0
    #allocation2 [shape = 'u8[65536]{0}', space=vmem, size = 0x10000, scoped, tag = 'input window, operand 3, single buffered']
    #allocation3 [shape = 's32[1]{0}', space=sflag, size = 0x4, scoped, tag = 'scoped memory for lex_q_forward.1']
    #allocation4 [shape = 'u8[65536]{0}', space=vmem, size = 0x10000, scoped, tag = 'input window, operand 5, single buffered']
    #allocation5 [shape = 's32[1]{0}', space=sflag, size = 0x4, scoped, tag = 'scoped memory for lex_q_forward.1']
    #allocation6 [shape = 'u8[65536]{0}', space=vmem, size = 0x10000, scoped, tag = 'input window, operand 7, single buffered']
    #allocation7 [shape = 'u8[65536]{0}', space=vmem, size = 0x10000, scoped, tag = 'input window, operand 9, single buffered']
    #allocation8 [shape = 's32[1]{0}', space=sflag, size = 0x4, scoped, tag = 'scoped memory for lex_q_forward.1']
    #allocation9 [shape = 'u8[65536]{0}', space=vmem, size = 0x10000, scoped, tag = 'input window, operand 13, single buffered']
    %20 = vsyncpa [#allocation3], 0
    %21 = vsyncpa [#allocation5], 0
    %22 = vsyncpa [#allocation8], 0
    // Predicated region
    $region2: #{lex_q_forward.1} parent=1 // pred_check
      _
    $region3: #{lex_q_forward.1} parent=1 // pred_check_branch
      %24 = sbr.rel (0) target = $region5
    $region4: #{lex_q_forward.1} parent=1 // pred_region
      _
    $region5: #{lex_q_forward.1} parent=1 // pred_fallthru
      _
    // Predicated region
    $region6: #{lex_q_forward.1} parent=1 // pred_check
      _
    $region7: #{lex_q_forward.1} parent=1 // pred_check_branch
      %26 = sbr.rel (0) target = $region9
    $region8: #{lex_q_forward.1} parent=1 // pred_region
      _
    $region9: #{lex_q_forward.1} parent=1 // pred_fallthru
      _
    // Predicated region
    $region10: #{lex_q_forward.1} parent=1 // pred_check
      _
    $region11: #{lex_q_forward.1} parent=1 // pred_check_branch
      %28 = sbr.rel (0) target = $region13
    $region12: #{lex_q_forward.1} parent=1 // pred_region
      _
    $region13: #{lex_q_forward.1} parent=1 // pred_fallthru
      _
    // Predicated region
    $region14: #{lex_q_forward.1} parent=1 // pred_check
      _
    $region15: #{lex_q_forward.1} parent=1 // pred_check_branch
      %30 = sbr.rel (0) target = $region17
    $region16: #{lex_q_forward.1} parent=1 // pred_region
      %32 = vsyncadd [#allocation3], 0
      %s33 = sshll.u32 %s3, 4
      %s34 = int_to_ptr.hbm [resolvable:$true] %s33
      %s35 = sshll.u32 [#allocation2], 4
      %s36 = int_to_ptr.vmem [resolvable:$true] %s35
      %41 = dma.hbm_to_vmem [thread:$0]  %s34, 2048, %s36, [#allocation3], 128, 128, 8
    $region17: #{lex_q_forward.1} parent=1 // pred_fallthru
      _
    // Predicated region
    $region18: #{lex_q_forward.1} parent=1 // pred_check
      _
    $region19: #{lex_q_forward.1} parent=1 // pred_check_branch
      %43 = sbr.rel (0) target = $region21
    $region20: #{lex_q_forward.1} parent=1 // pred_region
      _
    $region21: #{lex_q_forward.1} parent=1 // pred_fallthru
      _
    // Predicated region
    $region22: #{lex_q_forward.1} parent=1 // pred_check
      _
    $region23: #{lex_q_forward.1} parent=1 // pred_check_branch
      %45 = sbr.rel (0) target = $region25
    $region24: #{lex_q_forward.1} parent=1 // pred_region
      %47 = vsyncadd [#allocation5], 0
      %s48 = sshll.u32 %s5, 4
      %s49 = int_to_ptr.hbm [resolvable:$true] %s48
      %s50 = sshll.u32 [#allocation4], 4
      %s51 = int_to_ptr.vmem [resolvable:$true] %s50
      %56 = dma.hbm_to_vmem [thread:$0]  %s49, 2048, %s51, [#allocation5], 128, 128, 8
    $region25: #{lex_q_forward.1} parent=1 // pred_fallthru
      _
    // Predicated region
    $region26: #{lex_q_forward.1} parent=1 // pred_check
      _
    $region27: #{lex_q_forward.1} parent=1 // pred_check_branch
      %58 = sbr.rel (0) target = $region29
    $region28: #{lex_q_forward.1} parent=1 // pred_region
      _
    $region29: #{lex_q_forward.1} parent=1 // pred_fallthru
      _
    // Predicated region
    $region30: #{lex_q_forward.1} parent=1 // pred_check
      _
    $region31: #{lex_q_forward.1} parent=1 // pred_check_branch
      %60 = sbr.rel (0) target = $region33
    $region32: #{lex_q_forward.1} parent=1 // pred_region
      %62 = vsyncadd [#allocation5], 0
      %s63 = sshll.u32 %s7, 4
      %s64 = int_to_ptr.hbm [resolvable:$true] %s63
      %s65 = sshll.u32 [#allocation6], 4
      %s66 = int_to_ptr.vmem [resolvable:$true] %s65
      %71 = dma.hbm_to_vmem [thread:$0]  %s64, 2048, %s66, [#allocation5], 128, 128, 8
    $region33: #{lex_q_forward.1} parent=1 // pred_fallthru
      _
    // Predicated region
    $region34: #{lex_q_forward.1} parent=1 // pred_check
      _
    $region35: #{lex_q_forward.1} parent=1 // pred_check_branch
      %73 = sbr.rel (0) target = $region37
    $region36: #{lex_q_forward.1} parent=1 // pred_region
      _
    $region37: #{lex_q_forward.1} parent=1 // pred_fallthru
      _
    // Predicated region
    $region38: #{lex_q_forward.1} parent=1 // pred_check
      _
    $region39: #{lex_q_forward.1} parent=1 // pred_check_branch
      %75 = sbr.rel (0) target = $region41
    $region40: #{lex_q_forward.1} parent=1 // pred_region
      %77 = vsyncadd [#allocation8], 0
      %s78 = sshll.u32 %s9, 4
      %s79 = int_to_ptr.hbm [resolvable:$true] %s78
      %s80 = sshll.u32 [#allocation7], 4
      %s81 = int_to_ptr.vmem [resolvable:$true] %s80
      %86 = dma.hbm_to_vmem [thread:$0]  %s79, 2048, %s81, [#allocation8], 128, 128, 8
    $region41: #{lex_q_forward.1} parent=1 // pred_fallthru
      _
    // Predicated region
    $region42: #{lex_q_forward.1} parent=1 // pred_check
      _
    $region43: #{lex_q_forward.1} parent=1 // pred_check_branch
      %88 = sbr.rel (0) target = $region45
    $region44: #{lex_q_forward.1} parent=1 // pred_region
      _
    $region45: #{lex_q_forward.1} parent=1 // pred_fallthru
      _
    // Predicated region
    $region46: #{lex_q_forward.1} parent=1 // pred_check
      _
    $region47: #{lex_q_forward.1} parent=1 // pred_check_branch
      %90 = sbr.rel (0) target = $region49
    $region48: #{lex_q_forward.1} parent=1 // pred_region
      _
    $region49: #{lex_q_forward.1} parent=1 // pred_fallthru
      _
    // Predicated region
    $region50: #{lex_q_forward.1} parent=1 // pred_check
      _
    $region51: #{lex_q_forward.1} parent=1 // pred_check_branch
      %92 = sbr.rel (0) target = $region53
    $region52: #{lex_q_forward.1} parent=1 // pred_region
      _
    $region53: #{lex_q_forward.1} parent=1 // pred_fallthru
      _
    // Predicated region
    $region54: #{lex_q_forward.1} parent=1 // pred_check
      _
    $region55: #{lex_q_forward.1} parent=1 // pred_check_branch
      %94 = sbr.rel (0) target = $region57
    $region56: #{lex_q_forward.1} parent=1 // pred_region
      %96 = vsyncadd [#allocation8], 0
      %s97 = sshll.u32 %s13, 4
      %s98 = int_to_ptr.hbm [resolvable:$true] %s97
      %s99 = sshll.u32 [#allocation9], 4
      %s100 = int_to_ptr.vmem [resolvable:$true] %s99
      %105 = dma.hbm_to_vmem [thread:$0]  %s98, 2048, %s100, [#allocation8], 128, 128, 8
    $region57: #{lex_q_forward.1} parent=1 // pred_fallthru
      _
    // Predicated region
    $region58: #{lex_q_forward.1} parent=1 // pred_check
      _
    $region59: #{lex_q_forward.1} parent=1 // pred_check_branch
      %107 = sbr.rel (0) target = $region61
    $region60: #{lex_q_forward.1} parent=1 // pred_region
      _
    $region61: #{lex_q_forward.1} parent=1 // pred_fallthru
      _
    // Predicated region
    $region62: #{lex_q_forward.1} parent=1 // pred_check
      _
    $region63: #{lex_q_forward.1} parent=1 // pred_check_branch
      %109 = sbr.rel (0) target = $region65
    $region64: #{lex_q_forward.1} parent=1 // pred_region
      %111 = dma.done [#allocation3], 2048
    $region65: #{lex_q_forward.1} parent=1 // pred_fallthru
      _
    // Predicated region
    $region66: #{lex_q_forward.1} parent=1 // pred_check
      _
    $region67: #{lex_q_forward.1} parent=1 // pred_check_branch
      %113 = sbr.rel (0) target = $region69
    $region68: #{lex_q_forward.1} parent=1 // pred_region
      %115 = dma.done [#allocation5], 2048
    $region69: #{lex_q_forward.1} parent=1 // pred_fallthru
      _
    // Predicated region
    $region70: #{lex_q_forward.1} parent=1 // pred_check
      _
    $region71: #{lex_q_forward.1} parent=1 // pred_check_branch
      %117 = sbr.rel (0) target = $region73
    $region72: #{lex_q_forward.1} parent=1 // pred_region
      %119 = dma.done [#allocation5], 2048
    $region73: #{lex_q_forward.1} parent=1 // pred_fallthru
      _
    // Predicated region
    $region74: #{lex_q_forward.1} parent=1 // pred_check
      _
    $region75: #{lex_q_forward.1} parent=1 // pred_check_branch
      %121 = sbr.rel (0) target = $region77
    $region76: #{lex_q_forward.1} parent=1 // pred_region
      %123 = dma.done [#allocation8], 2048
    $region77: #{lex_q_forward.1} parent=1 // pred_fallthru
      _
    // Predicated region
    $region78: #{lex_q_forward.1} parent=1 // pred_check
      _
    $region79: #{lex_q_forward.1} parent=1 // pred_check_branch
      %125 = sbr.rel (0) target = $region81
    $region80: #{lex_q_forward.1} parent=1 // pred_region
      %127 = dma.done [#allocation8], 2048
    $region81: #{lex_q_forward.1} parent=1 // pred_fallthru
      _
    %v128 = vld [vmem:[%s0] sm:$0xff]
    %v129 = vlaneseq
    %v130 = vshrl.u32 %v129, 7
    %vm131 = vcmp.lt.s32.totalorder %v130, 8
    %v132 = vsel %vm131, 1, 0
    %v133 = vcvt.s32.f32 %v132
    %v134 = vmul.f32 %v128, %v133
    %v135 = vrot.slane %v134, 4
    %v136 = vadd.f32 %v134, %v135
    %v137 = vrot.slane %v136, 2
    %v138 = vadd.f32 %v136, %v137
    %v139 = vrot.slane %v138, 1
    %v140 = vadd.f32 %v138, %v139
    %v141 = vmul.f32 %v140, 0.125
    %v142 = vsub.f32 %v128, %v141
    %v143 = vmul.f32 %v142, %v142
    %v144 = vmul.f32 %v143, %v133
    %v145 = vrot.slane %v144, 4
    %v146 = vadd.f32 %v144, %v145
    %v147 = vrot.slane %v146, 2
    %v148 = vadd.f32 %v146, %v147
    %v149 = vrot.slane %v148, 1
    %v150 = vadd.f32 %v148, %v149
    %v151 = vmul.f32 %v150, 0.125
    %v152 = vld [vmem:[%s1] sm:$0x1]
    %v153 = vadd.f32 %v151, 1e-05
    %v154 = vrsqrt.pop %v153
    %v155 = vmul.f32 %v154, %v153
    %v156 = vmul.f32 %v155, %v154
    %v157 = vmul.f32 0.5, %v156
    %v158 = vsub.f32 1.5, %v157
    %v159 = vmul.f32 %v154, %v158
    %vm160 = vweird.f32 %v153
    %vm161 = vweird.f32 %v154
    %vm162 = vmor %vm160, %vm161
    %v163 = vsel %vm162, %v154, %v159
    %v164 = vmul.f32 %v152, %v163
    %v165 = vld [vmem:[%s2] sm:$0x1]
    %v166 = vmul.f32 %v141, %v164
    %v167 = vsub.f32 %v165, %v166
    %v169 = vperm.slane %v164, 0
    %v171 = vmul.f32 %v128, %v169
    %v173 = vperm.slane %v167, 0
    %v175 = vadd.f32 %v171, %v173
    %v176 = vld [vmem:[#allocation2] sm:$0xff]
    %v177 = vld [vmem:[#allocation2 + $0x8] sm:$0xff]
    %v178 = vld [vmem:[#allocation2 + $0x10] sm:$0xff]
    %v179 = vld [vmem:[#allocation2 + $0x18] sm:$0xff]
    %v180 = vld [vmem:[#allocation2 + $0x20] sm:$0xff]
    %v181 = vld [vmem:[#allocation2 + $0x28] sm:$0xff]
    %v182 = vld [vmem:[#allocation2 + $0x30] sm:$0xff]
    %v183 = vld [vmem:[#allocation2 + $0x38] sm:$0xff]
    %v184 = vld [vmem:[#allocation2 + $0x40] sm:$0xff]
    %v185 = vld [vmem:[#allocation2 + $0x48] sm:$0xff]
    %v186 = vld [vmem:[#allocation2 + $0x50] sm:$0xff]
    %v187 = vld [vmem:[#allocation2 + $0x58] sm:$0xff]
    %v188 = vld [vmem:[#allocation2 + $0x60] sm:$0xff]
    %v189 = vld [vmem:[#allocation2 + $0x68] sm:$0xff]
    %v190 = vld [vmem:[#allocation2 + $0x70] sm:$0xff]
    %v191 = vld [vmem:[#allocation2 + $0x78] sm:$0xff]
    %v192 = vld [vmem:[%s4] sm:$0x1]
    %v194 = vperm.slane %v192, 0
    %196 = vmatpush.msra.mxu0 %v191
    %197 = vmatpush.msra.mxu0 %v190
    %198 = vmatpush.msra.mxu0 %v189
    %199 = vmatpush.msra.mxu0 %v188
    %200 = vmatpush.msra.mxu0 %v187
    %201 = vmatpush.msra.mxu0 %v186
    %202 = vmatpush.msra.mxu0 %v185
    %203 = vmatpush.msra.mxu0 %v184
    %204 = vmatpush.msra.mxu0 %v183
    %205 = vmatpush.msra.mxu0 %v182
    %206 = vmatpush.msra.mxu0 %v181
    %207 = vmatpush.msra.mxu0 %v180
    %208 = vmatpush.msra.mxu0 %v179
    %209 = vmatpush.msra.mxu0 %v178
    %210 = vmatpush.msra.mxu0 %v177
    %211 = vmatpush.msra.mxu0 %v176
    %212 = vmatmul.f32.gmra.mxu0 %v175
    %v213 = vpop.f32.mrf.mxu0
    %v214 = vadd.f32 %v194, %v213
    %215 = vdwg.mxu0
    %v216 = vmax.f32 %v214, 0.0
    %v217 = vld [vmem:[#allocation4] sm:$0xff]
    %v218 = vld [vmem:[#allocation4 + $0x8] sm:$0xff]
    %v219 = vld [vmem:[#allocation4 + $0x10] sm:$0xff]
    %v220 = vld [vmem:[#allocation4 + $0x18] sm:$0xff]
    %v221 = vld [vmem:[#allocation4 + $0x20] sm:$0xff]
    %v222 = vld [vmem:[#allocation4 + $0x28] sm:$0xff]
    %v223 = vld [vmem:[#allocation4 + $0x30] sm:$0xff]
    %v224 = vld [vmem:[#allocation4 + $0x38] sm:$0xff]
    %v225 = vld [vmem:[#allocation4 + $0x40] sm:$0xff]
    %v226 = vld [vmem:[#allocation4 + $0x48] sm:$0xff]
    %v227 = vld [vmem:[#allocation4 + $0x50] sm:$0xff]
    %v228 = vld [vmem:[#allocation4 + $0x58] sm:$0xff]
    %v229 = vld [vmem:[#allocation4 + $0x60] sm:$0xff]
    %v230 = vld [vmem:[#allocation4 + $0x68] sm:$0xff]
    %v231 = vld [vmem:[#allocation4 + $0x70] sm:$0xff]
    %v232 = vld [vmem:[#allocation4 + $0x78] sm:$0xff]
    %v233 = vld [vmem:[%s6] sm:$0x1]
    %v235 = vperm.slane %v233, 0
    %237 = vmatpush.msra.mxu0 %v232
    %238 = vmatpush.msra.mxu0 %v231
    %239 = vmatpush.msra.mxu0 %v230
    %240 = vmatpush.msra.mxu0 %v229
    %241 = vmatpush.msra.mxu0 %v228
    %242 = vmatpush.msra.mxu0 %v227
    %243 = vmatpush.msra.mxu0 %v226
    %244 = vmatpush.msra.mxu0 %v225
    %245 = vmatpush.msra.mxu0 %v224
    %246 = vmatpush.msra.mxu0 %v223
    %247 = vmatpush.msra.mxu0 %v222
    %248 = vmatpush.msra.mxu0 %v221
    %249 = vmatpush.msra.mxu0 %v220
    %250 = vmatpush.msra.mxu0 %v219
    %251 = vmatpush.msra.mxu0 %v218
    %252 = vmatpush.msra.mxu0 %v217
    %253 = vmatmul.f32.gmra.mxu0 %v216
    %v254 = vpop.f32.mrf.mxu0
    %v255 = vadd.f32 %v235, %v254
    %256 = vdwg.mxu0
    %v257 = vmax.f32 %v255, 0.0
    %v258 = vld [vmem:[#allocation6] sm:$0xff]
    %v259 = vld [vmem:[#allocation6 + $0x8] sm:$0xff]
    %v260 = vld [vmem:[#allocation6 + $0x10] sm:$0xff]
    %v261 = vld [vmem:[#allocation6 + $0x18] sm:$0xff]
    %v262 = vld [vmem:[#allocation6 + $0x20] sm:$0xff]
    %v263 = vld [vmem:[#allocation6 + $0x28] sm:$0xff]
    %v264 = vld [vmem:[#allocation6 + $0x30] sm:$0xff]
    %v265 = vld [vmem:[#allocation6 + $0x38] sm:$0xff]
    %v266 = vld [vmem:[#allocation6 + $0x40] sm:$0xff]
    %v267 = vld [vmem:[#allocation6 + $0x48] sm:$0xff]
    %v268 = vld [vmem:[#allocation6 + $0x50] sm:$0xff]
    %v269 = vld [vmem:[#allocation6 + $0x58] sm:$0xff]
    %v270 = vld [vmem:[#allocation6 + $0x60] sm:$0xff]
    %v271 = vld [vmem:[#allocation6 + $0x68] sm:$0xff]
    %v272 = vld [vmem:[#allocation6 + $0x70] sm:$0xff]
    %v273 = vld [vmem:[#allocation6 + $0x78] sm:$0xff]
    %v274 = vld [vmem:[%s8] sm:$0x1]
    %v276 = vperm.slane %v274, 0
    %278 = vmatpush.msra.mxu0 %v273
    %279 = vmatpush.msra.mxu0 %v272
    %280 = vmatpush.msra.mxu0 %v271
    %281 = vmatpush.msra.mxu0 %v270
    %282 = vmatpush.msra.mxu0 %v269
    %283 = vmatpush.msra.mxu0 %v268
    %284 = vmatpush.msra.mxu0 %v267
    %285 = vmatpush.msra.mxu0 %v266
    %286 = vmatpush.msra.mxu0 %v265
    %287 = vmatpush.msra.mxu0 %v264
    %288 = vmatpush.msra.mxu0 %v263
    %289 = vmatpush.msra.mxu0 %v262
    %290 = vmatpush.msra.mxu0 %v261
    %291 = vmatpush.msra.mxu0 %v260
    %292 = vmatpush.msra.mxu0 %v259
    %293 = vmatpush.msra.mxu0 %v258
    %294 = vmatmul.f32.gmra.mxu0 %v257
    %v295 = vpop.f32.mrf.mxu0
    %v296 = vadd.f32 %v276, %v295
    %297 = vdwg.mxu0
    %v298 = vmax.f32 %v296, 0.0
    %v299 = vld [vmem:[#allocation7] sm:$0xff]
    %v300 = vld [vmem:[#allocation7 + $0x8] sm:$0xff]
    %v301 = vld [vmem:[#allocation7 + $0x10] sm:$0xff]
    %v302 = vld [vmem:[#allocation7 + $0x18] sm:$0xff]
    %v303 = vld [vmem:[#allocation7 + $0x20] sm:$0xff]
    %v304 = vld [vmem:[#allocation7 + $0x28] sm:$0xff]
    %v305 = vld [vmem:[#allocation7 + $0x30] sm:$0xff]
    %v306 = vld [vmem:[#allocation7 + $0x38] sm:$0xff]
    %v307 = vld [vmem:[#allocation7 + $0x40] sm:$0xff]
    %v308 = vld [vmem:[#allocation7 + $0x48] sm:$0xff]
    %v309 = vld [vmem:[#allocation7 + $0x50] sm:$0xff]
    %v310 = vld [vmem:[#allocation7 + $0x58] sm:$0xff]
    %v311 = vld [vmem:[#allocation7 + $0x60] sm:$0xff]
    %v312 = vld [vmem:[#allocation7 + $0x68] sm:$0xff]
    %v313 = vld [vmem:[#allocation7 + $0x70] sm:$0xff]
    %v314 = vld [vmem:[#allocation7 + $0x78] sm:$0xff]
    %v315 = vld [vmem:[%s10] sm:$0x1]
    %v317 = vperm.slane %v315, 0
    %319 = vmatpush.msra.mxu0 %v314
    %320 = vmatpush.msra.mxu0 %v313
    %321 = vmatpush.msra.mxu0 %v312
    %322 = vmatpush.msra.mxu0 %v311
    %323 = vmatpush.msra.mxu0 %v310
    %324 = vmatpush.msra.mxu0 %v309
    %325 = vmatpush.msra.mxu0 %v308
    %326 = vmatpush.msra.mxu0 %v307
    %327 = vmatpush.msra.mxu0 %v306
    %328 = vmatpush.msra.mxu0 %v305
    %329 = vmatpush.msra.mxu0 %v304
    %330 = vmatpush.msra.mxu0 %v303
    %331 = vmatpush.msra.mxu0 %v302
    %332 = vmatpush.msra.mxu0 %v301
    %333 = vmatpush.msra.mxu0 %v300
    %334 = vmatpush.msra.mxu0 %v299
    %335 = vmatmul.f32.gmra.mxu0 %v298
    %v336 = vpop.f32.mrf.mxu0
    %v337 = vadd.f32 %v317, %v336
    %338 = vdwg.mxu0
    %v339 = vmax.f32 %v337, 0.0
    %v340 = vadd.f32 %v216, %v339
    %v341 = vmul.f32 %v340, %v133
    %v342 = vrot.slane %v341, 4
    %v343 = vadd.f32 %v341, %v342
    %v344 = vrot.slane %v343, 2
    %v345 = vadd.f32 %v343, %v344
    %v346 = vrot.slane %v345, 1
    %v347 = vadd.f32 %v345, %v346
    %v348 = vmul.f32 %v347, 0.125
    %v349 = vsub.f32 %v340, %v348
    %v350 = vmul.f32 %v349, %v349
    %v351 = vmul.f32 %v350, %v133
    %v352 = vrot.slane %v351, 4
    %v353 = vadd.f32 %v351, %v352
    %v354 = vrot.slane %v353, 2
    %v355 = vadd.f32 %v353, %v354
    %v356 = vrot.slane %v355, 1
    %v357 = vadd.f32 %v355, %v356
    %v358 = vmul.f32 %v357, 0.125
    %v359 = vld [vmem:[%s11] sm:$0x1]
    %v360 = vadd.f32 %v358, 1e-05
    %v361 = vrsqrt.pop %v360
    %v362 = vmul.f32 %v361, %v360
    %v363 = vmul.f32 %v362, %v361
    %v364 = vmul.f32 0.5, %v363
    %v365 = vsub.f32 1.5, %v364
    %v366 = vmul.f32 %v361, %v365
    %vm367 = vweird.f32 %v360
    %vm368 = vweird.f32 %v361
    %vm369 = vmor %vm367, %vm368
    %v370 = vsel %vm369, %v361, %v366
    %v371 = vmul.f32 %v359, %v370
    %v372 = vld [vmem:[%s12] sm:$0x1]
    %v373 = vmul.f32 %v348, %v371
    %v374 = vsub.f32 %v372, %v373
    %v376 = vperm.slane %v371, 0
    %v378 = vmul.f32 %v340, %v376
    %v380 = vperm.slane %v374, 0
    %v382 = vadd.f32 %v378, %v380
    %v383 = vld [vmem:[#allocation9] sm:$0xff]
    %v384 = vld [vmem:[#allocation9 + $0x8] sm:$0xff]
    %v385 = vld [vmem:[#allocation9 + $0x10] sm:$0xff]
    %v386 = vld [vmem:[#allocation9 + $0x18] sm:$0xff]
    %v387 = vld [vmem:[#allocation9 + $0x20] sm:$0xff]
    %v388 = vld [vmem:[#allocation9 + $0x28] sm:$0xff]
    %v389 = vld [vmem:[#allocation9 + $0x30] sm:$0xff]
    %v390 = vld [vmem:[#allocation9 + $0x38] sm:$0xff]
    %v391 = vld [vmem:[#allocation9 + $0x40] sm:$0xff]
    %v392 = vld [vmem:[#allocation9 + $0x48] sm:$0xff]
    %v393 = vld [vmem:[#allocation9 + $0x50] sm:$0xff]
    %v394 = vld [vmem:[#allocation9 + $0x58] sm:$0xff]
    %v395 = vld [vmem:[#allocation9 + $0x60] sm:$0xff]
    %v396 = vld [vmem:[#allocation9 + $0x68] sm:$0xff]
    %v397 = vld [vmem:[#allocation9 + $0x70] sm:$0xff]
    %v398 = vld [vmem:[#allocation9 + $0x78] sm:$0xff]
    %v399 = vld [vmem:[%s14] sm:$0x1]
    %v401 = vperm.slane %v399, 0
    %403 = vmatpush.msra.mxu0 %v398
    %404 = vmatpush.msra.mxu0 %v397
    %405 = vmatpush.msra.mxu0 %v396
    %406 = vmatpush.msra.mxu0 %v395
    %407 = vmatpush.msra.mxu0 %v394
    %408 = vmatpush.msra.mxu0 %v393
    %409 = vmatpush.msra.mxu0 %v392
    %410 = vmatpush.msra.mxu0 %v391
    %411 = vmatpush.msra.mxu0 %v390
    %412 = vmatpush.msra.mxu0 %v389
    %413 = vmatpush.msra.mxu0 %v388
    %414 = vmatpush.msra.mxu0 %v387
    %415 = vmatpush.msra.mxu0 %v386
    %416 = vmatpush.msra.mxu0 %v385
    %417 = vmatpush.msra.mxu0 %v384
    %418 = vmatpush.msra.mxu0 %v383
    %419 = vmatmul.f32.gmra.mxu0 %v382
    %v420 = vpop.f32.mrf.mxu0
    %v421 = vadd.f32 %v401, %v420
    %422 = vdwg.mxu0
    %v423 = vlaneseq
    %v424 = vand.u32 %v423, 127
    %vm425 = vcmp.lt.s32.totalorder %v424, 3
    %v426 = vxor.u32 %v421, 2147483648
    %v427 = vmul.f32 %v426, 1.442695
    %v428 = vpow.pop %v427
    %v429 = vadd.f32 %v428, 1.0
    %v430 = vrcp.pop %v429
    %v431 = vmul.f32 %v429, %v430
    %v432 = vsub.f32 1.0, %v431
    %v433 = vmul.f32 %v430, %v432
    %v434 = vadd.f32 %v430, %v433
    %vm435 = vweird.f32 %v429
    %vm436 = vweird.f32 %v430
    %vm437 = vmor %vm435, %vm436
    %v438 = vsel %vm437, %v430, %v434
    %v439 = vand.u32 2147483647, %v429
    %vm440 = vcmp.eq.f32.partialorder %v439, 8.507059e+37
    %v441 = vand.u32 %v429, 2147483648
    %v442 = vor.u32 1.1754944e-38, %v441
    %v443 = vsel %vm440, %v442, %v438
    %v444 = vmul.f32 1.0, %v443
    %v445 = vsub.f32 %v444, 1.0
    %v446 = vsel %vm425, %v445, %v421
    %447 = vst [vmem:[%s15] sm:$0xff] %v446
    // Predicated region
    $region82: #{lex_q_forward.1} parent=1 // pred_check
      _
    $region83: #{lex_q_forward.1} parent=1 // pred_check_branch
      %449 = sbr.rel (0) target = $region85
    $region84: #{lex_q_forward.1} parent=1 // pred_region
      _
    $region85: #{lex_q_forward.1} parent=1 // pred_fallthru
      _
    // Predicated region
    $region86: #{lex_q_forward.1} parent=1 // pred_check
      _
    $region87: #{lex_q_forward.1} parent=1 // pred_check_branch
      %451 = sbr.rel (0) target = $region89
    $region88: #{lex_q_forward.1} parent=1 // pred_region
      _
    $region89: #{lex_q_forward.1} parent=1 // pred_fallthru
      _
    %452 = vsyncpa [#allocation3], 1
    %453 = vsyncpa [#allocation5], 1
    %454 = vsyncpa [#allocation8], 1

</llo_original>
